<compile_context>
chip_gen: v7x
topology: tpu7x:2x2x1
jax: 0.10.0
libtpu: 0.0.40
codegen_flags: <defaults>
</compile_context>

<pallas_src>
import functools

import jax
import jax.numpy as jnp
from jax import lax
from jax.experimental import pallas as pl
from jax.experimental.pallas import tpu as pltpu

LANES = 128
BLOCK_ROWS = 1024  # rows (sublanes) per grid block; 1024x128 f32 = 512 KiB


# --------------------------------------------------------------------------
# Kernels
# --------------------------------------------------------------------------
def _reduce_kernel(pred_ref, target_ref, *rest, beta, has_weight,
                   block_rows, rows, need_mask):
    """Per-block partial sums (no elementwise HBM output).

    Unweighted: rest = (loss_sum_ref,)
    Weighted:   rest = (weight_ref, loss_sum_ref, pw_sum_ref, wmax_ref)
    Each *_ref output block is (1, LANES); the wrapper finishes the reduce.
    """
    if has_weight:
        weight_ref, lsum_ref, pwsum_ref, wmax_ref = rest
    else:
        (lsum_ref,) = rest

    p = pred_ref[...]
    t = target_ref[...]
    diff = jnp.abs(p - t)
    # hoisted constants: multiply instead of divide
    loss = jnp.where(diff < beta, diff * diff * (0.5 / beta), diff - (0.5 * beta))

    if has_weight:
        w = weight_ref[...]
        loss = loss * w
        pw = p * w

    if need_mask:
        # Last grid block may extend past `rows`; mask the out-of-bounds rows
        # (their contents are undefined garbage reads).
        i = pl.program_id(0)
        row_ids = lax.broadcasted_iota(jnp.int32, (block_rows, LANES), 0)
        valid = (i * block_rows + row_ids) < rows
        loss = jnp.where(valid, loss, 0.0)
        if has_weight:
            pw = jnp.where(valid, pw, 0.0)
            w = jnp.where(valid, w, 0.0)

    # Sublane-axis reduction only; the tiny cross-block / cross-lane finish
    # happens in the wrapper.
    lsum_ref[...] = jnp.sum(loss, axis=0, keepdims=True)
    if has_weight:
        pwsum_ref[...] = jnp.sum(pw, axis=0, keepdims=True)
        wmax_ref[...] = jnp.max(w, axis=0, keepdims=True)


def _elementwise_kernel(pred_ref, target_ref, *rest, beta, has_weight):
    """Elementwise loss (reduction='none'). OOB writes of a ragged last block
    are dropped by Pallas; padded lanes are sliced off in the wrapper."""
    if has_weight:
        weight_ref, out_ref = rest
    else:
        (out_ref,) = rest
    diff = jnp.abs(pred_ref[...] - target_ref[...])
    loss = jnp.where(diff < beta, diff * diff * (0.5 / beta), diff - (0.5 * beta))
    if has_weight:
        loss = loss * weight_ref[...]
    out_ref[...] = loss.astype(out_ref.dtype)


# --------------------------------------------------------------------------
# Wrappers
# --------------------------------------------------------------------------
def _to_lane_view(x):
    """Flatten to (rows, 128). Free (no copy) when numel % 128 == 0."""
    flat = x.reshape(-1)
    pad = (-flat.shape[0]) % LANES
    if pad:
        # TODO(synk): this path copies the array; only hit when numel % 128 != 0.
        flat = jnp.pad(flat, (0, pad))
    return flat.reshape(-1, LANES)


def _block_layout(rows):
    block_rows = min(BLOCK_ROWS, rows)
    grid = pl.cdiv(rows, block_rows)
    need_mask = (grid * block_rows) != rows
    return block_rows, grid, need_mask


def _smooth_l1_reduce(p2, t2, w2, beta):
    """Returns loss_sum (unweighted) or (loss_sum, pred*w_sum, any_w_pos)."""
    rows = p2.shape[0]
    block_rows, grid, need_mask = _block_layout(rows)
    has_weight = w2 is not None

    blk = pl.BlockSpec((block_rows, LANES), lambda i: (i, 0))
    psum_spec = pl.BlockSpec((1, LANES), lambda i: (i, 0))
    psum_shape = jax.ShapeDtypeStruct((grid, LANES), jnp.float32)

    kernel = functools.partial(
        _reduce_kernel, beta=float(beta), has_weight=has_weight,
        block_rows=block_rows, rows=rows, need_mask=need_mask)

    if has_weight:
        in_specs = [blk, blk, blk]
        out_specs = (psum_spec, psum_spec, psum_spec)
        out_shape = (psum_shape, psum_shape, psum_shape)
        args = (p2, t2, w2)
    else:
        in_specs = [blk, blk]
        out_specs = psum_spec
        out_shape = psum_shape
        args = (p2, t2)

    outs = pl.pallas_call(
        kernel,
        out_shape=out_shape,
        grid_spec=pltpu.PrefetchScalarGridSpec(
            num_scalar_prefetch=0,
            grid=(grid,),
            in_specs=in_specs,
            out_specs=out_specs,
        ),
        compiler_params=pltpu.CompilerParams(
            dimension_semantics=("parallel",)),
    )(*args)

    if has_weight:
        lsum, pwsum, wmax = outs
        return jnp.sum(lsum), jnp.sum(pwsum), jnp.max(wmax) > 0.0
    return jnp.sum(outs)


def _smooth_l1_elementwise(p2, t2, w2, beta):
    rows = p2.shape[0]
    block_rows, grid, _ = _block_layout(rows)
    has_weight = w2 is not None

    blk = pl.BlockSpec((block_rows, LANES), lambda i: (i, 0))
    args = (p2, t2, w2) if has_weight else (p2, t2)

    return pl.pallas_call(
        functools.partial(_elementwise_kernel, beta=float(beta),
                          has_weight=has_weight),
        out_shape=jax.ShapeDtypeStruct((rows, LANES), jnp.float32),
        grid_spec=pltpu.PrefetchScalarGridSpec(
            num_scalar_prefetch=0,
            grid=(grid,),
            in_specs=[blk] * len(args),
            out_specs=blk,
        ),
        compiler_params=pltpu.CompilerParams(
            dimension_semantics=("parallel",)),
    )(*args)


# --------------------------------------------------------------------------
# Module
# --------------------------------------------------------------------------
class SmoothL1Loss:
    """JAX/Pallas equivalent of mmdet SmoothL1Loss (beta fixed at 1.0)."""

    def __init__(self, reduction: str = "mean", loss_weight: float = 1.0):
        self.reduction = reduction
        self.loss_weight = loss_weight
        self.beta = 1.0  # smooth_l1_loss default in the reference

    def __call__(self, pred, target, weight=None, avg_factor=None,
                 reduction_override=None):
        pred = jnp.asarray(pred, jnp.float32)
        target = jnp.asarray(target, jnp.float32)

        # target.numel() == 0 -> pred.sum() * 0
        if target.size == 0:
            return jnp.sum(pred) * 0.0
        assert pred.shape == target.shape

        reduction = reduction_override if reduction_override else self.reduction

        has_weight = weight is not None
        if has_weight:
            weight = jnp.asarray(weight, jnp.float32)
            if weight.shape != pred.shape:
                if weight.ndim == pred.ndim - 1:
                    weight = jnp.expand_dims(weight, 1)
                # TODO(synk): lower-rank weights are materialized via broadcast;
                # could instead be broadcast in-kernel via index_map/ds(stride=0).
                weight = jnp.broadcast_to(weight, pred.shape)

        n = pred.size
        orig_shape = pred.shape
        p2 = _to_lane_view(pred)
        t2 = _to_lane_view(target)
        w2 = _to_lane_view(weight) if has_weight else None

        if reduction == "none":
            loss2 = _smooth_l1_elementwise(p2, t2, w2, self.beta)
            loss = loss2.reshape(-1)[:n].reshape(orig_shape)
            # TODO(synk): torch's "all weights <= 0 -> scalar (pred*weight).sum()"
            # early return is not applied under reduction='none' to stay
            # jit-traceable (output shapes would differ between branches).
            return self.loss_weight * loss

        # mean / sum: reduce-only kernels, no elementwise HBM write.
        if has_weight:
            total, pw_total, any_pos = _smooth_l1_reduce(p2, t2, w2, self.beta)
        else:
            total = _smooth_l1_reduce(p2, t2, None, self.beta)

        if reduction == "mean":
            denom = avg_factor if avg_factor is not None else n
            reduced = total / denom
        else:  # 'sum'
            reduced = total

        out = self.loss_weight * reduced
        if has_weight:
            # mmdet special case: if no weight > 0, return (pred * weight).sum()
            # (no loss_weight / reduction applied). Traced, jit-compatible.
            out = jnp.where(any_pos, out, pw_total)
        return out


# --------------------------------------------------------------------------
# Reference + self-test
# --------------------------------------------------------------------------
def _reference(pred, target, weight, reduction, loss_weight, avg_factor=None):
    diff = jnp.abs(pred - target)
    loss = jnp.where(diff < 1.0, 0.5 * diff * diff, diff - 0.5)
    if weight is not None:
        loss = loss * weight
    if reduction == "mean":
        loss = jnp.sum(loss) / (avg_factor if avg_factor is not None else loss.size)
    elif reduction == "sum":
        loss = jnp.sum(loss)
    return loss_weight * loss


if __name__ == "__main__":
    key = jax.random.PRNGKey(0)
    k1, k2, k3, k4, k5, k6 = jax.random.split(key, 6)

    shape = (2, 4, 16, 16)  # NCHW
    pred = jax.random.normal(k1, shape, dtype=jnp.float32)
    target = jax.random.normal(k2, shape, dtype=jnp.float32)
    weight = jax.random.uniform(k3, shape, dtype=jnp.float32)

    mod = SmoothL1Loss(reduction="mean", loss_weight=2.0)

    # mean reduction, no weight (unweighted reduce kernel, 2 streams)
    out_mean = jax.block_until_ready(mod(pred, target))
    assert jnp.allclose(out_mean, _reference(pred, target, None, "mean", 2.0),
                        rtol=1e-5, atol=1e-5)

    # sum reduction with weight (weighted reduce kernel)
    out_sum = jax.block_until_ready(
        mod(pred, target, weight=weight, reduction_override="sum"))
    assert jnp.allclose(out_sum, _reference(pred, target, weight, "sum", 2.0),
                        rtol=1e-5, atol=1e-4)

    # mean with avg_factor override
    out_avg = jax.block_until_ready(
        mod(pred, target, weight=weight, avg_factor=123.0))
    assert jnp.allclose(out_avg,
                        _reference(pred, target, weight, "mean", 2.0, 123.0),
                        rtol=1e-5, atol=1e-5)

    # 'none' reduction (elementwise kernel)
    out_none = jax.block_until_ready(
        mod(pred, target, weight=weight, reduction_override="none"))
    assert out_none.shape == shape
    assert jnp.allclose(out_none, _reference(pred, target, weight, "none", 2.0),
                        rtol=1e-5, atol=1e-5)

    # special case: all weights <= 0 -> (pred * weight).sum(), traced (no host sync)
    w_neg = -jax.random.uniform(k4, shape, dtype=jnp.float32)
    out_special = jax.block_until_ready(mod(pred, target, weight=w_neg))
    assert jnp.allclose(out_special, jnp.sum(pred * w_neg), rtol=1e-5, atol=1e-5)

    # works under jax.jit (no Python bool on traced values)
    jit_mean = jax.jit(lambda p, t, w: mod(p, t, weight=w))
    out_jit = jax.block_until_ready(jit_mean(pred, target, weight))
    assert jnp.allclose(out_jit, _reference(pred, target, weight, "mean", 2.0),
                        rtol=1e-5, atol=1e-5)

    # multi-block path with ragged last block (rows=1300 > 1024, masked in-kernel)
    big_shape = (1300, 128)
    bp = jax.random.normal(k5, big_shape, dtype=jnp.float32)
    bt = jax.random.normal(k6, big_shape, dtype=jnp.float32)
    out_big = jax.block_until_ready(mod(bp, bt, reduction_override="sum"))
    assert jnp.allclose(out_big, _reference(bp, bt, None, "sum", 2.0),
                        rtol=1e-4, atol=1e-3)

    # unaligned element count (numel % 128 != 0) exercises the pad fallback
    sp = jax.random.normal(k1, (3, 5, 7), dtype=jnp.float32)
    st = jax.random.normal(k2, (3, 5, 7), dtype=jnp.float32)
    out_small = jax.block_until_ready(mod(sp, st))
    assert jnp.allclose(out_small, _reference(sp, st, None, "mean", 2.0),
                        rtol=1e-5, atol=1e-5)

    print("KERNEL_OK")
</pallas_src>

<mosaic_0001>
module attributes {stable_mosaic.version = 11 : i64} {
  func.func @_reduce_kernel(%arg0: i32, %arg1: memref<16x128xf32, #tpu.memory_space<vmem>>, %arg2: memref<16x128xf32, #tpu.memory_space<vmem>>, %arg3: memref<1x128xf32, #tpu.memory_space<vmem>>) attributes {dimension_semantics = [#tpu.dimension_semantics<parallel>], iteration_bounds = array<i64: 1>, scalar_prefetch = 0 : i64, scratch_operands = 0 : i64, tpu.core_type = #tpu.core_type<tc>, window_params = [{transform_indices = @transform_0, window_bounds = array<i64: 16, 128>}, {transform_indices = @transform_1, window_bounds = array<i64: 16, 128>}, {transform_indices = @transform_2, window_bounds = array<i64: 1, 128>}]} {
    %c0 = arith.constant 0 : index
    %c0_0 = arith.constant 0 : index
    %0 = vector.load %arg1[%c0, %c0_0] : memref<16x128xf32, #tpu.memory_space<vmem>>, vector<16x128xf32>
    %c0_1 = arith.constant 0 : index
    %c0_2 = arith.constant 0 : index
    %1 = vector.load %arg2[%c0_1, %c0_2] : memref<16x128xf32, #tpu.memory_space<vmem>>, vector<16x128xf32>
    %2 = arith.subf %0, %1 : vector<16x128xf32>
    %3 = math.absf %2 : vector<16x128xf32>
    %cst = arith.constant 1.000000e+00 : f32
    %4 = vector.broadcast %cst : f32 to vector<16x128xf32>
    %5 = arith.cmpf olt, %3, %4 : vector<16x128xf32>
    %6 = arith.mulf %3, %3 : vector<16x128xf32>
    %cst_3 = arith.constant 5.000000e-01 : f32
    %7 = vector.broadcast %cst_3 : f32 to vector<16x128xf32>
    %8 = arith.mulf %6, %7 : vector<16x128xf32>
    %cst_4 = arith.constant 5.000000e-01 : f32
    %9 = vector.broadcast %cst_4 : f32 to vector<16x128xf32>
    %10 = arith.subf %3, %9 : vector<16x128xf32>
    %11 = arith.select %5, %8, %10 : vector<16x128xi1>, vector<16x128xf32>
    %cst_5 = arith.constant dense<0.000000e+00> : vector<128xf32>
    %12 = vector.multi_reduction <add>, %11, %cst_5 [0] : vector<16x128xf32> to vector<128xf32>
    %13 = vector.shape_cast %12 : vector<128xf32> to vector<1x128xf32>
    %c0_6 = arith.constant 0 : index
    %c0_7 = arith.constant 0 : index
    %14 = vector.load %arg3[%c0_6, %c0_7] : memref<1x128xf32, #tpu.memory_space<vmem>>, vector<1x128xf32>
    tpu.vector_store %arg3[%c0_6, %c0_7], %13 {strides = array<i32>} : memref<1x128xf32, #tpu.memory_space<vmem>>, vector<1x128xf32>,
    return
  }
  func.func @transform_0(%arg0: i32) -> (i32, i32) {
    %c0_i32 = arith.constant 0 : i32
    %c0_i32_0 = arith.constant 0 : i32
    return %arg0, %c0_i32 : i32, i32
  }
  func.func @transform_1(%arg0: i32) -> (i32, i32) {
    %c0_i32 = arith.constant 0 : i32
    %c0_i32_0 = arith.constant 0 : i32
    return %arg0, %c0_i32 : i32, i32
  }
  func.func @transform_2(%arg0: i32) -> (i32, i32) {
    %c0_i32 = arith.constant 0 : i32
    %c0_i32_0 = arith.constant 0 : i32
    return %arg0, %c0_i32 : i32, i32
  }
}

</mosaic_0001>

<llo_original>
// kernel: tpu_custom_call.1
$region0: #{tpu_custom_call.1}
  #allocation0 [shape = 'u32[]', space=smem, size = 0x4, offset = 0x4, fixed_abs, tag = 'smem constant byte address 0x4 - core index']
  #allocation1 [shape = 'u32[144,128]{1,0:T(1,128)}', space=vmem, size = 0x12000, scoped, tag = 'internal scratch']
  %s0 = inlined_call_operand.hbm [shape: f32[16,128], index: 0, kind: input, shape index: {}]
  %s1 = inlined_call_operand.hbm [shape: f32[16,128], index: 1, kind: input, shape index: {}]
  %s2 = inlined_call_operand.hbm [shape: f32[1,128], index: 2, kind: output, shape index: {}]
  %s3 = sld [smem:[#allocation0]]
  $region26: #{tpu_custom_call.1} parent=0
    _
  %s5 = ssub.s32 1, %s3
  %s6 = scalar_select 0, %s5, %s3
  $region1: #{tpu_custom_call.1} parent=0
    #allocation2 [shape = 'u8[8192]{0}', space=vmem, size = 0x2000, scoped, tag = 'input window, operand 0, single buffered']
    #allocation3 [shape = 's32[1]{0}', space=sflag, size = 0x4, scoped, tag = 'scoped memory for tpu_custom_call.1']
    #allocation4 [shape = 's32[1]{0}', space=sflag, size = 0x4, scoped, tag = 'scoped memory for tpu_custom_call.1']
    #allocation5 [shape = 'u8[8192]{0}', space=vmem, size = 0x2000, scoped, tag = 'input window, operand 1, single buffered']
    #allocation6 [shape = 's32[1]{0}', space=sflag, size = 0x4, scoped, tag = 'scoped memory for tpu_custom_call.1']
    #allocation7 [shape = 'u8[512]{0}', space=vmem, size = 0x400, scoped, tag = 'output window, operand 0, single buffered']
    %7 = vsyncpa [#allocation3], 0
    %8 = vsyncpa [#allocation6], 0
    %9 = vsyncpa [#allocation4], 0
    // Predicated region
    $region2: #{tpu_custom_call.1} parent=1 // pred_check
      _
    $region3: #{tpu_custom_call.1} parent=1 // pred_check_branch
      %11 = sbr.rel (0) target = $region5
    $region4: #{tpu_custom_call.1} parent=1 // pred_region
      %s13 = ssub.s32 256, 256
      %14 = vsyncadd [#allocation3], %s13
      %s15 = sshll.u32 [#allocation2], 4
      %s16 = int_to_ptr.vmem [resolvable:$true] %s15
      %21 = dma.hbm_to_vmem [thread:$0]  %s0, 256, %s16, [#allocation3], 128, 128, 8
    $region5: #{tpu_custom_call.1} parent=1 // pred_fallthru
      _
    // Predicated region
    $region6: #{tpu_custom_call.1} parent=1 // pred_check
      _
    $region7: #{tpu_custom_call.1} parent=1 // pred_check_branch
      %23 = sbr.rel (0) target = $region9
    $region8: #{tpu_custom_call.1} parent=1 // pred_region
      %s25 = ssub.s32 256, 256
      %26 = vsyncadd [#allocation6], %s25
      %s27 = sshll.u32 [#allocation5], 4
      %s28 = int_to_ptr.vmem [resolvable:$true] %s27
      %33 = dma.hbm_to_vmem [thread:$0]  %s1, 256, %s28, [#allocation6], 128, 128, 8
    $region9: #{tpu_custom_call.1} parent=1 // pred_fallthru
      _
    // Predicated region
    $region10: #{tpu_custom_call.1} parent=1 // pred_check
      _
    $region11: #{tpu_custom_call.1} parent=1 // pred_check_branch
      %35 = sbr.rel (0) target = $region13
    $region12: #{tpu_custom_call.1} parent=1 // pred_region
      %36 = dma.done [#allocation3], 256
    $region13: #{tpu_custom_call.1} parent=1 // pred_fallthru
      _
    // Predicated region
    $region14: #{tpu_custom_call.1} parent=1 // pred_check
      _
    $region15: #{tpu_custom_call.1} parent=1 // pred_check_branch
      %38 = sbr.rel (0) target = $region17
    $region16: #{tpu_custom_call.1} parent=1 // pred_region
      %39 = dma.done [#allocation6], 256
    $region17: #{tpu_custom_call.1} parent=1 // pred_fallthru
      _
    %v40 = vld [vmem:[#allocation2] sm:$0xff]
    %v41 = vld [vmem:[#allocation2 + $0x8] sm:$0xff]
    %v42 = vld [vmem:[#allocation5] sm:$0xff]
    %v43 = vld [vmem:[#allocation5 + $0x8] sm:$0xff]
    %v44 = vsub.f32 %v40, %v42
    %v45 = vsub.f32 %v41, %v43
    %v46 = vand.u32 2147483647, %v44
    %v47 = vand.u32 2147483647, %v45
    %vm48 = vcmp.lt.f32.partialorder %v46, 1.0
    %vm49 = vcmp.lt.f32.partialorder %v47, 1.0
    %v50 = vmul.f32 %v46, %v46
    %v51 = vmul.f32 %v47, %v47
    %v52 = vmul.f32 %v50, 0.5
    %v53 = vmul.f32 %v51, 0.5
    %v54 = vsub.f32 %v46, 0.5
    %v55 = vsub.f32 %v47, 0.5
    %v56 = vsel %vm48, %v52, %v54
    %v57 = vsel %vm49, %v53, %v55
    %v58 = vadd.f32 %v56, %v57
    %v59 = vrot.slane %v58, 4
    %v60 = vadd.f32 %v58, %v59
    %v61 = vrot.slane %v60, 2
    %v62 = vadd.f32 %v60, %v61
    %v63 = vrot.slane %v62, 1
    %v64 = vadd.f32 %v62, %v63
    %65 = vst [vmem:[#allocation7] sm:$0x1] %v64
    // Predicated region
    $region18: #{tpu_custom_call.1} parent=1 // pred_check
      _
    $region19: #{tpu_custom_call.1} parent=1 // pred_check_branch
      %67 = sbr.rel (0) target = $region21
    $region20: #{tpu_custom_call.1} parent=1 // pred_region
      %s69 = ssub.s32 16, 16
      %70 = vsyncadd [#allocation4], %s69
      %s72 = sshll.u32 [#allocation7], 4
      %s73 = int_to_ptr.vmem [resolvable:$true] %s72
      %75 = dma.vmem_to_hbm [thread:$0]  %s73, 16, %s2, [#allocation4]
    $region21: #{tpu_custom_call.1} parent=1 // pred_fallthru
      _
    // Predicated region
    $region22: #{tpu_custom_call.1} parent=1 // pred_check
      _
    $region23: #{tpu_custom_call.1} parent=1 // pred_check_branch
      %77 = sbr.rel (0) target = $region25
    $region24: #{tpu_custom_call.1} parent=1 // pred_region
      %78 = dma.done [#allocation4], 16
    $region25: #{tpu_custom_call.1} parent=1 // pred_fallthru
      _
    %79 = vsyncpa [#allocation3], 1
    %80 = vsyncpa [#allocation6], 1
    %81 = vsyncpa [#allocation4], 1

</llo_original>
